<compile_context>
chip_gen: v5e
topology: v5e:2x2
jax: 0.10.0
libtpu: 0.0.40
codegen_flags: <defaults>
</compile_context>

<pallas_src>
import jax
import jax.numpy as jnp
from jax.experimental import pallas as pl
from jax.experimental.pallas import tpu as pltpu

LANE = 128
HIDDEN = (80, 64)


def _round_up(x, m):
    return (x + m - 1) // m * m


def qnetwork_kernel(x_ref, w1_ref, b1_ref, w2_ref, b2_ref, w3_ref, b3_ref,
                    o_ref):
    # Layer 1: MXU matmul, f32 accumulation; bias + ReLU in f32 on the VPU.
    h1 = jnp.dot(x_ref[...], w1_ref[...], preferred_element_type=jnp.float32)
    h1 = jnp.maximum(h1 + b1_ref[...], 0.0)
    # Layer 2.
    h2 = jnp.dot(h1.astype(w2_ref.dtype), w2_ref[...],
                 preferred_element_type=jnp.float32)
    h2 = jnp.maximum(h2 + b2_ref[...], 0.0)
    # Layer 3 (Q-values, no activation).  Lane-dense (TILE_B, 128) store.
    o = jnp.dot(h2.astype(w3_ref.dtype), w3_ref[...],
                preferred_element_type=jnp.float32)
    o_ref[...] = (o + b3_ref[...]).astype(o_ref.dtype)


def qnetwork_forward(x, params, *, tile_b=1024, compute_dtype=jnp.bfloat16):
    """QNetwork forward pass with a batch-tiled Pallas kernel.

    Weights/biases are zero-padded to 128 lanes once in the wrapper and kept
    VMEM-resident (constant block index) across all batch tiles.
    """
    w1, b1, w2, b2, w3, b3 = params
    batch, state_size = x.shape
    h1_dim, h2_dim = w1.shape[1], w2.shape[1]
    action_size = w3.shape[1]

    # ---- one-time zero-padding of params to the 128-lane grid ----
    h1_p = _round_up(h1_dim, LANE)
    h2_p = _round_up(h2_dim, LANE)
    out_p = _round_up(action_size, LANE)

    w1p = jnp.zeros((state_size, h1_p), compute_dtype).at[:, :h1_dim].set(
        w1.astype(compute_dtype))
    b1p = jnp.zeros((1, h1_p), jnp.float32).at[:, :h1_dim].set(
        b1.reshape(1, -1).astype(jnp.float32))
    w2p = jnp.zeros((h1_p, h2_p), compute_dtype).at[:h1_dim, :h2_dim].set(
        w2.astype(compute_dtype))
    b2p = jnp.zeros((1, h2_p), jnp.float32).at[:, :h2_dim].set(
        b2.reshape(1, -1).astype(jnp.float32))
    w3p = jnp.zeros((h2_p, out_p), compute_dtype).at[:h2_dim, :action_size].set(
        w3.astype(compute_dtype))
    b3p = jnp.zeros((1, out_p), jnp.float32).at[:, :action_size].set(
        b3.reshape(1, -1).astype(jnp.float32))

    # ---- batch tiling: pad rows so the grid divides evenly ----
    tile_b = min(tile_b, _round_up(batch, 16))  # multiple of 16 (bf16 sublanes)
    padded_batch = _round_up(batch, tile_b)
    xp = x.astype(compute_dtype)
    if padded_batch != batch:
        xp = jnp.pad(xp, ((0, padded_batch - batch), (0, 0)))
    num_tiles = padded_batch // tile_b

    def const_spec(shape):
        return pl.BlockSpec(shape, lambda i: (0, 0))

    # Advisory cost hint for XLA scheduling around the custom call.
    flops = 2 * padded_batch * (state_size * h1_p + h1_p * h2_p + h2_p * out_p)
    bytes_accessed = (xp.size * 2 + padded_batch * out_p * 4
                      + (w1p.size + w2p.size + w3p.size) * 2
                      + (b1p.size + b2p.size + b3p.size) * 4)
    cost = pl.CostEstimate(flops=flops, transcendentals=0,
                           bytes_accessed=bytes_accessed)

    out = pl.pallas_call(
        qnetwork_kernel,
        out_shape=jax.ShapeDtypeStruct((padded_batch, out_p), jnp.float32),
        grid=(num_tiles,),
        in_specs=[
            # Streamed batch tile of x (last dim == full array dim, legal).
            pl.BlockSpec((tile_b, state_size), lambda i: (i, 0)),
            # Weights / biases: constant block index -> VMEM-resident.
            const_spec(w1p.shape), const_spec(b1p.shape),
            const_spec(w2p.shape), const_spec(b2p.shape),
            const_spec(w3p.shape), const_spec(b3p.shape),
        ],
        out_specs=pl.BlockSpec((tile_b, out_p), lambda i: (i, 0)),
        compiler_params=pltpu.CompilerParams(
            dimension_semantics=("parallel",)),
        cost_estimate=cost,
    )(xp, w1p, b1p, w2p, b2p, w3p, b3p)

    return out[:batch, :action_size]


def init_qnetwork_params(key, state_size, action_size):
    """Deterministic init mirroring nn.Linear's default U(-1/sqrt(fan_in), ...)."""
    dims = [state_size, HIDDEN[0], HIDDEN[1], action_size]
    params = []
    for i in range(3):
        key, kw, kb = jax.random.split(key, 3)
        fan_in, fan_out = dims[i], dims[i + 1]
        bound = 1.0 / jnp.sqrt(jnp.float32(fan_in))
        w = jax.random.uniform(kw, (fan_in, fan_out), jnp.float32,
                               minval=-bound, maxval=bound)
        b = jax.random.uniform(kb, (1, fan_out), jnp.float32,
                               minval=-bound, maxval=bound)
        params += [w, b]
    return tuple(params)


def qnetwork_reference(x, params, compute_dtype=jnp.float32):
    """Pure-JAX reference; compute_dtype lets us match the kernel's bf16 operands."""
    w1, b1, w2, b2, w3, b3 = params
    h1 = jnp.dot(x.astype(compute_dtype), w1.astype(compute_dtype),
                 preferred_element_type=jnp.float32) + b1
    h1 = jnp.maximum(h1, 0.0)
    h2 = jnp.dot(h1.astype(compute_dtype), w2.astype(compute_dtype),
                 preferred_element_type=jnp.float32) + b2
    h2 = jnp.maximum(h2, 0.0)
    return jnp.dot(h2.astype(compute_dtype), w3.astype(compute_dtype),
                   preferred_element_type=jnp.float32) + b3


if __name__ == "__main__":
    state_size = 8
    action_size = 4
    batch = 32  # small demo batch; kernel tiles/pads arbitrary batch sizes

    key = jax.random.PRNGKey(0)
    key, kx = jax.random.split(key)
    x = jax.random.normal(kx, (batch, state_size), jnp.float32)
    params = init_qnetwork_params(key, state_size, action_size)

    out = qnetwork_forward(x, params)
    out = jax.block_until_ready(out)
    assert out.shape == (batch, action_size)

    # Check against a reference with matching (bf16-operand, f32-accumulate)
    # precision, and loosely against the full-f32 reference.
    ref_bf16 = qnetwork_reference(x, params, compute_dtype=jnp.bfloat16)
    ref_f32 = qnetwork_reference(x, params, compute_dtype=jnp.float32)
    assert jnp.allclose(out, ref_bf16, atol=2e-3, rtol=2e-3), \
        "mismatch vs matched-precision reference"
    assert jnp.allclose(out, ref_f32, atol=5e-2, rtol=5e-2), \
        "mismatch vs f32 reference"

    print("KERNEL_OK")
</pallas_src>

<mosaic_0001>
module attributes {stable_mosaic.version = 11 : i64} {
  func.func @qnetwork_kernel(%arg0: i32, %arg1: memref<32x8xbf16, #tpu.memory_space<vmem>>, %arg2: memref<8x128xbf16, #tpu.memory_space<vmem>>, %arg3: memref<1x128xf32, #tpu.memory_space<vmem>>, %arg4: memref<128x128xbf16, #tpu.memory_space<vmem>>, %arg5: memref<1x128xf32, #tpu.memory_space<vmem>>, %arg6: memref<128x128xbf16, #tpu.memory_space<vmem>>, %arg7: memref<1x128xf32, #tpu.memory_space<vmem>>, %arg8: memref<32x128xf32, #tpu.memory_space<vmem>>) attributes {dimension_semantics = [#tpu.dimension_semantics<parallel>], iteration_bounds = array<i64: 1>, scalar_prefetch = 0 : i64, scratch_operands = 0 : i64, tpu.core_type = #tpu.core_type<tc>, window_params = [{transform_indices = @transform_0, window_bounds = array<i64: 32, 8>}, {pipeline_mode = #tpu.pipeline_mode<synchronous>, transform_indices = @transform_1, window_bounds = array<i64: 8, 128>}, {pipeline_mode = #tpu.pipeline_mode<synchronous>, transform_indices = @transform_2, window_bounds = array<i64: 1, 128>}, {pipeline_mode = #tpu.pipeline_mode<synchronous>, transform_indices = @transform_3, window_bounds = array<i64: 128, 128>}, {pipeline_mode = #tpu.pipeline_mode<synchronous>, transform_indices = @transform_4, window_bounds = array<i64: 1, 128>}, {pipeline_mode = #tpu.pipeline_mode<synchronous>, transform_indices = @transform_5, window_bounds = array<i64: 128, 128>}, {pipeline_mode = #tpu.pipeline_mode<synchronous>, transform_indices = @transform_6, window_bounds = array<i64: 1, 128>}, {transform_indices = @transform_7, window_bounds = array<i64: 32, 128>}]} {
    %c0 = arith.constant 0 : index
    %c0_0 = arith.constant 0 : index
    %0 = vector.load %arg1[%c0, %c0_0] : memref<32x8xbf16, #tpu.memory_space<vmem>>, vector<32x8xbf16>
    %c0_1 = arith.constant 0 : index
    %c0_2 = arith.constant 0 : index
    %1 = vector.load %arg2[%c0_1, %c0_2] : memref<8x128xbf16, #tpu.memory_space<vmem>>, vector<8x128xbf16>
    %cst = arith.constant dense<0.000000e+00> : vector<32x128xf32>
    %2 = tpu.matmul %0, %1, %cst {dimension_numbers = #tpu.dot_dimension_numbers<[1], [0], [0], [1], [0, 0, 1, 1], [], []>} : vector<32x8xbf16>, vector<8x128xbf16>, vector<32x128xf32> -> vector<32x128xf32>
    %c0_3 = arith.constant 0 : index
    %c0_4 = arith.constant 0 : index
    %3 = vector.load %arg3[%c0_3, %c0_4] : memref<1x128xf32, #tpu.memory_space<vmem>>, vector<1x128xf32>
    %4 = vector.broadcast %3 : vector<1x128xf32> to vector<32x128xf32>
    %5 = arith.addf %2, %4 : vector<32x128xf32>
    %cst_5 = arith.constant 0.000000e+00 : f32
    %6 = vector.broadcast %cst_5 : f32 to vector<32x128xf32>
    %7 = arith.maximumf %5, %6 : vector<32x128xf32>
    %8 = arith.truncf %7 : vector<32x128xf32> to vector<32x128xbf16>
    %c0_6 = arith.constant 0 : index
    %c0_7 = arith.constant 0 : index
    %9 = vector.load %arg4[%c0_6, %c0_7] : memref<128x128xbf16, #tpu.memory_space<vmem>>, vector<128x128xbf16>
    %cst_8 = arith.constant dense<0.000000e+00> : vector<32x128xf32>
    %10 = tpu.matmul %8, %9, %cst_8 {dimension_numbers = #tpu.dot_dimension_numbers<[1], [0], [0], [1], [0, 0, 1, 1], [], []>} : vector<32x128xbf16>, vector<128x128xbf16>, vector<32x128xf32> -> vector<32x128xf32>
    %c0_9 = arith.constant 0 : index
    %c0_10 = arith.constant 0 : index
    %11 = vector.load %arg5[%c0_9, %c0_10] : memref<1x128xf32, #tpu.memory_space<vmem>>, vector<1x128xf32>
    %12 = vector.broadcast %11 : vector<1x128xf32> to vector<32x128xf32>
    %13 = arith.addf %10, %12 : vector<32x128xf32>
    %cst_11 = arith.constant 0.000000e+00 : f32
    %14 = vector.broadcast %cst_11 : f32 to vector<32x128xf32>
    %15 = arith.maximumf %13, %14 : vector<32x128xf32>
    %16 = arith.truncf %15 : vector<32x128xf32> to vector<32x128xbf16>
    %c0_12 = arith.constant 0 : index
    %c0_13 = arith.constant 0 : index
    %17 = vector.load %arg6[%c0_12, %c0_13] : memref<128x128xbf16, #tpu.memory_space<vmem>>, vector<128x128xbf16>
    %cst_14 = arith.constant dense<0.000000e+00> : vector<32x128xf32>
    %18 = tpu.matmul %16, %17, %cst_14 {dimension_numbers = #tpu.dot_dimension_numbers<[1], [0], [0], [1], [0, 0, 1, 1], [], []>} : vector<32x128xbf16>, vector<128x128xbf16>, vector<32x128xf32> -> vector<32x128xf32>
    %c0_15 = arith.constant 0 : index
    %c0_16 = arith.constant 0 : index
    %19 = vector.load %arg7[%c0_15, %c0_16] : memref<1x128xf32, #tpu.memory_space<vmem>>, vector<1x128xf32>
    %20 = vector.broadcast %19 : vector<1x128xf32> to vector<32x128xf32>
    %21 = arith.addf %18, %20 : vector<32x128xf32>
    %c0_17 = arith.constant 0 : index
    %c0_18 = arith.constant 0 : index
    %22 = vector.load %arg8[%c0_17, %c0_18] : memref<32x128xf32, #tpu.memory_space<vmem>>, vector<32x128xf32>
    tpu.vector_store %arg8[%c0_17, %c0_18], %21 {strides = array<i32>} : memref<32x128xf32, #tpu.memory_space<vmem>>, vector<32x128xf32>,
    return
  }
  func.func @transform_0(%arg0: i32) -> (i32, i32) {
    %c0_i32 = arith.constant 0 : i32
    %c0_i32_0 = arith.constant 0 : i32
    return %arg0, %c0_i32 : i32, i32
  }
  func.func @transform_1(%arg0: i32) -> (i32, i32) {
    %c0_i32 = arith.constant 0 : i32
    %c0_i32_0 = arith.constant 0 : i32
    %c0_i32_1 = arith.constant 0 : i32
    return %c0_i32, %c0_i32_0 : i32, i32
  }
  func.func @transform_2(%arg0: i32) -> (i32, i32) {
    %c0_i32 = arith.constant 0 : i32
    %c0_i32_0 = arith.constant 0 : i32
    %c0_i32_1 = arith.constant 0 : i32
    return %c0_i32, %c0_i32_0 : i32, i32
  }
  func.func @transform_3(%arg0: i32) -> (i32, i32) {
    %c0_i32 = arith.constant 0 : i32
    %c0_i32_0 = arith.constant 0 : i32
    %c0_i32_1 = arith.constant 0 : i32
    return %c0_i32, %c0_i32_0 : i32, i32
  }
  func.func @transform_4(%arg0: i32) -> (i32, i32) {
    %c0_i32 = arith.constant 0 : i32
    %c0_i32_0 = arith.constant 0 : i32
    %c0_i32_1 = arith.constant 0 : i32
    return %c0_i32, %c0_i32_0 : i32, i32
  }
  func.func @transform_5(%arg0: i32) -> (i32, i32) {
    %c0_i32 = arith.constant 0 : i32
    %c0_i32_0 = arith.constant 0 : i32
    %c0_i32_1 = arith.constant 0 : i32
    return %c0_i32, %c0_i32_0 : i32, i32
  }
  func.func @transform_6(%arg0: i32) -> (i32, i32) {
    %c0_i32 = arith.constant 0 : i32
    %c0_i32_0 = arith.constant 0 : i32
    %c0_i32_1 = arith.constant 0 : i32
    return %c0_i32, %c0_i32_0 : i32, i32
  }
  func.func @transform_7(%arg0: i32) -> (i32, i32) {
    %c0_i32 = arith.constant 0 : i32
    %c0_i32_0 = arith.constant 0 : i32
    return %arg0, %c0_i32 : i32, i32
  }
}

</mosaic_0001>

<llo_original>
// kernel: tpu_custom_call.1
$region0: #{tpu_custom_call.1}
  #allocation0 [shape = 'u32[]', space=smem, size = 0x4, offset = 0x4, fixed_abs, tag = 'smem constant byte address 0x4 - core index']
  #allocation1 [shape = 'u32[72,128]{1,0:T(1,128)}', space=vmem, size = 0x9000, scoped, tag = 'internal scratch']
  %s0 = inlined_call_operand.vmem [shape: bf16[32,8], index: 0, kind: input, shape index: {}]
  %s1 = inlined_call_operand.vmem [shape: bf16[8,128], index: 1, kind: input, shape index: {}]
  %s2 = inlined_call_operand.vmem [shape: f32[1,128], index: 2, kind: input, shape index: {}]
  %s3 = inlined_call_operand.hbm [shape: bf16[128,128], index: 3, kind: input, shape index: {}]
  %s4 = inlined_call_operand.vmem [shape: f32[1,128], index: 4, kind: input, shape index: {}]
  %s5 = inlined_call_operand.hbm [shape: bf16[128,128], index: 5, kind: input, shape index: {}]
  %s6 = inlined_call_operand.vmem [shape: f32[1,128], index: 6, kind: input, shape index: {}]
  %s7 = inlined_call_operand.hbm [shape: f32[32,128], index: 7, kind: output, shape index: {}]
  %s8 = sld [smem:[#allocation0]]
  $region46: #{tpu_custom_call.1} parent=0
    _
  %s10 = ssub.s32 1, %s8
  %s11 = scalar_select 0, %s10, %s8
  $region1: #{tpu_custom_call.1} parent=0
    #allocation2 [shape = 'u8[32768]{0}', space=vmem, size = 0x8000, scoped, tag = 'input window, operand 3, single buffered']
    #allocation3 [shape = 's32[1]{0}', space=sflag, size = 0x4, scoped, tag = 'scoped memory for tpu_custom_call.1']
    #allocation4 [shape = 's32[1]{0}', space=sflag, size = 0x4, scoped, tag = 'scoped memory for tpu_custom_call.1']
    #allocation5 [shape = 'u8[32768]{0}', space=vmem, size = 0x8000, scoped, tag = 'input window, operand 5, single buffered']
    #allocation6 [shape = 's32[1]{0}', space=sflag, size = 0x4, scoped, tag = 'scoped memory for tpu_custom_call.1']
    #allocation7 [shape = 'u8[16384]{0}', space=vmem, size = 0x4000, scoped, tag = 'output window, operand 0, single buffered']
    %12 = vsyncpa [#allocation3], 0
    %13 = vsyncpa [#allocation6], 0
    %14 = vsyncpa [#allocation4], 0
    // Predicated region
    $region2: #{tpu_custom_call.1} parent=1 // pred_check
      _
    $region3: #{tpu_custom_call.1} parent=1 // pred_check_branch
      %16 = sbr.rel (0) target = $region5
    $region4: #{tpu_custom_call.1} parent=1 // pred_region
      _
    $region5: #{tpu_custom_call.1} parent=1 // pred_fallthru
      _
    // Predicated region
    $region6: #{tpu_custom_call.1} parent=1 // pred_check
      _
    $region7: #{tpu_custom_call.1} parent=1 // pred_check_branch
      %18 = sbr.rel (0) target = $region9
    $region8: #{tpu_custom_call.1} parent=1 // pred_region
      _
    $region9: #{tpu_custom_call.1} parent=1 // pred_fallthru
      _
    // Predicated region
    $region10: #{tpu_custom_call.1} parent=1 // pred_check
      _
    $region11: #{tpu_custom_call.1} parent=1 // pred_check_branch
      %20 = sbr.rel (0) target = $region13
    $region12: #{tpu_custom_call.1} parent=1 // pred_region
      _
    $region13: #{tpu_custom_call.1} parent=1 // pred_fallthru
      _
    // Predicated region
    $region14: #{tpu_custom_call.1} parent=1 // pred_check
      _
    $region15: #{tpu_custom_call.1} parent=1 // pred_check_branch
      %22 = sbr.rel (0) target = $region17
    $region16: #{tpu_custom_call.1} parent=1 // pred_region
      %24 = vsyncadd [#allocation3], 0
      %s25 = sshll.u32 %s3, 4
      %s26 = int_to_ptr.hbm [resolvable:$true] %s25
      %s27 = sshll.u32 [#allocation2], 4
      %s28 = int_to_ptr.vmem [resolvable:$true] %s27
      %33 = dma.hbm_to_vmem [thread:$0]  %s26, 1024, %s28, [#allocation3], 64, 64, 4
    $region17: #{tpu_custom_call.1} parent=1 // pred_fallthru
      _
    // Predicated region
    $region18: #{tpu_custom_call.1} parent=1 // pred_check
      _
    $region19: #{tpu_custom_call.1} parent=1 // pred_check_branch
      %35 = sbr.rel (0) target = $region21
    $region20: #{tpu_custom_call.1} parent=1 // pred_region
      _
    $region21: #{tpu_custom_call.1} parent=1 // pred_fallthru
      _
    // Predicated region
    $region22: #{tpu_custom_call.1} parent=1 // pred_check
      _
    $region23: #{tpu_custom_call.1} parent=1 // pred_check_branch
      %37 = sbr.rel (0) target = $region25
    $region24: #{tpu_custom_call.1} parent=1 // pred_region
      %39 = vsyncadd [#allocation6], 0
      %s40 = sshll.u32 %s5, 4
      %s41 = int_to_ptr.hbm [resolvable:$true] %s40
      %s42 = sshll.u32 [#allocation5], 4
      %s43 = int_to_ptr.vmem [resolvable:$true] %s42
      %48 = dma.hbm_to_vmem [thread:$0]  %s41, 1024, %s43, [#allocation6], 64, 64, 4
    $region25: #{tpu_custom_call.1} parent=1 // pred_fallthru
      _
    // Predicated region
    $region26: #{tpu_custom_call.1} parent=1 // pred_check
      _
    $region27: #{tpu_custom_call.1} parent=1 // pred_check_branch
      %50 = sbr.rel (0) target = $region29
    $region28: #{tpu_custom_call.1} parent=1 // pred_region
      _
    $region29: #{tpu_custom_call.1} parent=1 // pred_fallthru
      _
    // Predicated region
    $region30: #{tpu_custom_call.1} parent=1 // pred_check
      _
    $region31: #{tpu_custom_call.1} parent=1 // pred_check_branch
      %52 = sbr.rel (0) target = $region33
    $region32: #{tpu_custom_call.1} parent=1 // pred_region
      %54 = dma.done [#allocation3], 1024
    $region33: #{tpu_custom_call.1} parent=1 // pred_fallthru
      _
    // Predicated region
    $region34: #{tpu_custom_call.1} parent=1 // pred_check
      _
    $region35: #{tpu_custom_call.1} parent=1 // pred_check_branch
      %56 = sbr.rel (0) target = $region37
    $region36: #{tpu_custom_call.1} parent=1 // pred_region
      %58 = dma.done [#allocation6], 1024
    $region37: #{tpu_custom_call.1} parent=1 // pred_fallthru
      _
    %v60 = vld [vmem:[%s0] sm:$0xf]
    %v61 = vld [vmem:[%s0 + $0x4] sm:$0xf]
    %v62 = vld [vmem:[%s0 + $0x8] sm:$0xf]
    %v63 = vld [vmem:[%s0 + $0xc] sm:$0xf]
    %v64 = vld [vmem:[%s1] sm:$0xf]
    %v65 = vld [vmem:[%s2] sm:$0x1]
    %v67 = vperm.slane %v65, 0
    %v73 = vunpack.c.l.b16 %v60
    %v74 = vunpack.c.l.b16 %v61
    %v75 = vunpack.c.l.b16 %v62
    %v76 = vunpack.c.l.b16 %v63
    %v77 = vpack.c.b16 %v74, %v73
    %v78 = vpack.c.b16 %v76, %v75
    %vm79 = vcmask 64512
    %v81 = vsel %vm79, %v77, 0
    %v84 = vsel %vm79, %v78, 0
    %vm86 = vcmask 1043456
    %v88 = vsel %vm86, %v64, 0
    %90 = vmatpush.bf16.msra.mxu0 0
    %91 = vmatpush.bf16.msra.mxu0 0
    %92 = vmatpush.bf16.msra.mxu0 0
    %93 = vmatpush.bf16.msra.mxu0 0
    %94 = vmatpush.bf16.msra.mxu0 0
    %95 = vmatpush.bf16.msra.mxu0 0
    %96 = vmatpush.bf16.msra.mxu0 0
    %97 = vmatpush.bf16.msra.mxu0 %v88
    %98 = vmatmul.bf16.gmra.mxu0 %v81
    %v99 = vpop.f32.mrf.mxu0
    %v100 = vadd.f32 %v67, %v99
    %v101 = vpop.f32.mrf.mxu0
    %v102 = vadd.f32 %v67, %v101
    %103 = vmatmul.bf16.gmra.mxu0 %v84
    %v104 = vpop.f32.mrf.mxu0
    %v105 = vadd.f32 %v67, %v104
    %v106 = vpop.f32.mrf.mxu0
    %v107 = vadd.f32 %v67, %v106
    %108 = vdwg.mxu0
    %v109 = vmax.f32 %v100, 0.0
    %v110 = vmax.f32 %v102, 0.0
    %v111 = vmax.f32 %v105, 0.0
    %v112 = vmax.f32 %v107, 0.0
    %v113 = vpack.c.bf16 %v110, %v109
    %v114 = vpack.c.bf16 %v112, %v111
    %v115 = vld [vmem:[#allocation2] sm:$0xf]
    %v116 = vld [vmem:[#allocation2 + $0x4] sm:$0xf]
    %v117 = vld [vmem:[#allocation2 + $0x8] sm:$0xf]
    %v118 = vld [vmem:[#allocation2 + $0xc] sm:$0xf]
    %v119 = vld [vmem:[#allocation2 + $0x10] sm:$0xf]
    %v120 = vld [vmem:[#allocation2 + $0x14] sm:$0xf]
    %v121 = vld [vmem:[#allocation2 + $0x18] sm:$0xf]
    %v122 = vld [vmem:[#allocation2 + $0x1c] sm:$0xf]
    %v123 = vld [vmem:[#allocation2 + $0x20] sm:$0xf]
    %v124 = vld [vmem:[#allocation2 + $0x24] sm:$0xf]
    %v125 = vld [vmem:[#allocation2 + $0x28] sm:$0xf]
    %v126 = vld [vmem:[#allocation2 + $0x2c] sm:$0xf]
    %v127 = vld [vmem:[#allocation2 + $0x30] sm:$0xf]
    %v128 = vld [vmem:[#allocation2 + $0x34] sm:$0xf]
    %v129 = vld [vmem:[#allocation2 + $0x38] sm:$0xf]
    %v130 = vld [vmem:[#allocation2 + $0x3c] sm:$0xf]
    %v131 = vld [vmem:[%s4] sm:$0x1]
    %v133 = vperm.slane %v131, 0
    %v151 = vunpack.c.l.b16 %v115
    %v152 = vunpack.c.l.b16 %v116
    %v153 = vunpack.c.l.b16 %v117
    %v154 = vunpack.c.l.b16 %v118
    %v155 = vunpack.c.l.b16 %v119
    %v156 = vunpack.c.l.b16 %v120
    %v157 = vunpack.c.l.b16 %v121
    %v158 = vunpack.c.l.b16 %v122
    %v159 = vunpack.c.l.b16 %v123
    %v160 = vunpack.c.l.b16 %v124
    %v161 = vunpack.c.l.b16 %v125
    %v162 = vunpack.c.l.b16 %v126
    %v163 = vunpack.c.l.b16 %v127
    %v164 = vunpack.c.l.b16 %v128
    %v165 = vunpack.c.l.b16 %v129
    %v166 = vunpack.c.l.b16 %v130
    %v167 = vpack.c.b16 %v152, %v151
    %v168 = vpack.c.b16 %v154, %v153
    %v169 = vpack.c.b16 %v156, %v155
    %v170 = vpack.c.b16 %v158, %v157
    %v171 = vpack.c.b16 %v160, %v159
    %v172 = vpack.c.b16 %v162, %v161
    %v173 = vpack.c.b16 %v164, %v163
    %v174 = vpack.c.b16 %v166, %v165
    %183 = vmatpush.bf16.msra.mxu0 %v174
    %184 = vmatpush.bf16.msra.mxu0 %v173
    %185 = vmatpush.bf16.msra.mxu0 %v172
    %186 = vmatpush.bf16.msra.mxu0 %v171
    %187 = vmatpush.bf16.msra.mxu0 %v170
    %188 = vmatpush.bf16.msra.mxu0 %v169
    %189 = vmatpush.bf16.msra.mxu0 %v168
    %190 = vmatpush.bf16.msra.mxu0 %v167
    %191 = vmatmul.bf16.gmra.mxu0 %v113
    %v192 = vpop.f32.mrf.mxu0
    %v193 = vadd.f32 %v133, %v192
    %v194 = vpop.f32.mrf.mxu0
    %v195 = vadd.f32 %v133, %v194
    %196 = vmatmul.bf16.gmra.mxu0 %v114
    %v197 = vpop.f32.mrf.mxu0
    %v198 = vadd.f32 %v133, %v197
    %v199 = vpop.f32.mrf.mxu0
    %v200 = vadd.f32 %v133, %v199
    %201 = vdwg.mxu0
    %v202 = vmax.f32 %v193, 0.0
    %v203 = vmax.f32 %v195, 0.0
    %v204 = vmax.f32 %v198, 0.0
    %v205 = vmax.f32 %v200, 0.0
    %v206 = vpack.c.bf16 %v203, %v202
    %v207 = vpack.c.bf16 %v205, %v204
    %v208 = vld [vmem:[#allocation5] sm:$0xf]
    %v209 = vld [vmem:[#allocation5 + $0x4] sm:$0xf]
    %v210 = vld [vmem:[#allocation5 + $0x8] sm:$0xf]
    %v211 = vld [vmem:[#allocation5 + $0xc] sm:$0xf]
    %v212 = vld [vmem:[#allocation5 + $0x10] sm:$0xf]
    %v213 = vld [vmem:[#allocation5 + $0x14] sm:$0xf]
    %v214 = vld [vmem:[#allocation5 + $0x18] sm:$0xf]
    %v215 = vld [vmem:[#allocation5 + $0x1c] sm:$0xf]
    %v216 = vld [vmem:[#allocation5 + $0x20] sm:$0xf]
    %v217 = vld [vmem:[#allocation5 + $0x24] sm:$0xf]
    %v218 = vld [vmem:[#allocation5 + $0x28] sm:$0xf]
    %v219 = vld [vmem:[#allocation5 + $0x2c] sm:$0xf]
    %v220 = vld [vmem:[#allocation5 + $0x30] sm:$0xf]
    %v221 = vld [vmem:[#allocation5 + $0x34] sm:$0xf]
    %v222 = vld [vmem:[#allocation5 + $0x38] sm:$0xf]
    %v223 = vld [vmem:[#allocation5 + $0x3c] sm:$0xf]
    %v224 = vld [vmem:[%s6] sm:$0x1]
    %v226 = vperm.slane %v224, 0
    %v244 = vunpack.c.l.b16 %v208
    %v245 = vunpack.c.l.b16 %v209
    %v246 = vunpack.c.l.b16 %v210
    %v247 = vunpack.c.l.b16 %v211
    %v248 = vunpack.c.l.b16 %v212
    %v249 = vunpack.c.l.b16 %v213
    %v250 = vunpack.c.l.b16 %v214
    %v251 = vunpack.c.l.b16 %v215
    %v252 = vunpack.c.l.b16 %v216
    %v253 = vunpack.c.l.b16 %v217
    %v254 = vunpack.c.l.b16 %v218
    %v255 = vunpack.c.l.b16 %v219
    %v256 = vunpack.c.l.b16 %v220
    %v257 = vunpack.c.l.b16 %v221
    %v258 = vunpack.c.l.b16 %v222
    %v259 = vunpack.c.l.b16 %v223
    %v260 = vpack.c.b16 %v245, %v244
    %v261 = vpack.c.b16 %v247, %v246
    %v262 = vpack.c.b16 %v249, %v248
    %v263 = vpack.c.b16 %v251, %v250
    %v264 = vpack.c.b16 %v253, %v252
    %v265 = vpack.c.b16 %v255, %v254
    %v266 = vpack.c.b16 %v257, %v256
    %v267 = vpack.c.b16 %v259, %v258
    %276 = vmatpush.bf16.msra.mxu0 %v267
    %277 = vmatpush.bf16.msra.mxu0 %v266
    %278 = vmatpush.bf16.msra.mxu0 %v265
    %279 = vmatpush.bf16.msra.mxu0 %v264
    %280 = vmatpush.bf16.msra.mxu0 %v263
    %281 = vmatpush.bf16.msra.mxu0 %v262
    %282 = vmatpush.bf16.msra.mxu0 %v261
    %283 = vmatpush.bf16.msra.mxu0 %v260
    %284 = vmatmul.bf16.gmra.mxu0 %v206
    %v285 = vpop.f32.mrf.mxu0
    %v286 = vadd.f32 %v226, %v285
    %v287 = vpop.f32.mrf.mxu0
    %v288 = vadd.f32 %v226, %v287
    %289 = vmatmul.bf16.gmra.mxu0 %v207
    %v290 = vpop.f32.mrf.mxu0
    %v291 = vadd.f32 %v226, %v290
    %v292 = vpop.f32.mrf.mxu0
    %v293 = vadd.f32 %v226, %v292
    %294 = vdwg.mxu0
    %295 = vst [vmem:[#allocation7] sm:$0xff] %v286
    %296 = vst [vmem:[#allocation7 + $0x8] sm:$0xff] %v288
    %297 = vst [vmem:[#allocation7 + $0x10] sm:$0xff] %v291
    %298 = vst [vmem:[#allocation7 + $0x18] sm:$0xff] %v293
    // Predicated region
    $region38: #{tpu_custom_call.1} parent=1 // pred_check
      _
    $region39: #{tpu_custom_call.1} parent=1 // pred_check_branch
      %300 = sbr.rel (0) target = $region41
    $region40: #{tpu_custom_call.1} parent=1 // pred_region
      %302 = vsyncadd [#allocation4], 0
      %s303 = sshll.u32 [#allocation7], 4
      %s304 = int_to_ptr.vmem [resolvable:$true] %s303
      %s305 = sshll.u32 %s7, 4
      %s306 = int_to_ptr.hbm [resolvable:$true] %s305
      %311 = dma.vmem_to_hbm [thread:$0]  %s304, 512, %s306, [#allocation4], 128, 128, 8
    $region41: #{tpu_custom_call.1} parent=1 // pred_fallthru
      _
    // Predicated region
    $region42: #{tpu_custom_call.1} parent=1 // pred_check
      _
    $region43: #{tpu_custom_call.1} parent=1 // pred_check_branch
      %313 = sbr.rel (0) target = $region45
    $region44: #{tpu_custom_call.1} parent=1 // pred_region
      %315 = dma.done [#allocation4], 512
    $region45: #{tpu_custom_call.1} parent=1 // pred_fallthru
      _
    %316 = vsyncpa [#allocation3], 1
    %317 = vsyncpa [#allocation6], 1
    %318 = vsyncpa [#allocation4], 1

</llo_original>
